<compile_context>
chip_gen: v5e
topology: v5e:2x2
jax: 0.10.0
libtpu: 0.0.40
codegen_flags: <defaults>
</compile_context>

<pallas_src>
import jax
import jax.numpy as jnp
from jax.experimental import pallas as pl
from jax.experimental.pallas import tpu as pltpu


def _round_up(x, m):
    return ((x + m - 1) // m) * m


def _vmem_capacity_bytes():
    """Per-TensorCore VMEM capacity. Conservative (v7x, 64 MiB) if unknown."""
    try:
        info = pltpu.get_tpu_info()
        cap = int(getattr(info, "vmem_capacity_bytes", 0))
        if cap > 0:
            return cap
    except Exception:
        pass
    return 64 * 1024 * 1024


# ---------------------------------------------------------------------------
# Fast path: whole (A, V, V) weight stack resident in VMEM, batch tiled (TM, V)
# ---------------------------------------------------------------------------
def _lvt_resident_kernel(act_ref, x_ref, w_ref, out_ref):
    """pred[r, :] = x[r, :] @ W[act[r]] over a (TM, V) row tile.

    act_ref: (TM, 1) int32   per-row action
    x_ref:   (TM, V)         before rows
    w_ref:   (A, V, V)       full weight stack (VMEM resident, DMA'd once)
    out_ref: (TM, V)
    Action selection is a mask on the LHS: rows whose action != a contribute
    exact zeros (relies on finite weights so 0 * w == 0).
    """
    x = x_ref[...]
    act = act_ref[...]                       # (TM, 1) int32
    nr_actions = w_ref.shape[0]
    acc = jnp.zeros(out_ref.shape, jnp.float32)
    # A is small & static -> unrolled.  NOTE: this does A-times redundant MXU
    # FLOPs; for A >= ~16 prefer the grouped fallback even when weights fit.
    # TODO(synk): collapse into one long-K matmul ((TM, A*V) @ (A*V, V)) for
    # better MXU cadence when A grows.
    for a in range(nr_actions):
        xa = jnp.where(act == a, x, jnp.zeros_like(x))
        acc = acc + jnp.dot(xa, w_ref[a], preferred_element_type=jnp.float32)
    out_ref[...] = acc.astype(out_ref.dtype)


def _lvt_resident(before, action_col, weights, *, out_dtype, tm,
                  single_buffer_weights, vmem_limit_bytes):
    Bp, V = before.shape
    A = weights.shape[0]

    w_item = jnp.dtype(weights.dtype).itemsize
    x_item = jnp.dtype(before.dtype).itemsize
    o_item = jnp.dtype(out_dtype).itemsize

    w_spec_kwargs = {}
    if single_buffer_weights:
        # Constant block index -> the stack is DMA'd from HBM exactly once; a
        # second pipeline buffer would be dead VMEM (matters most on v7x).
        w_spec_kwargs["pipeline_mode"] = pl.Buffered(1)

    cost = pl.CostEstimate(
        flops=2 * A * Bp * V * V,
        transcendentals=0,
        bytes_accessed=A * V * V * w_item + Bp * V * (x_item + o_item) + Bp * 4,
    )

    return pl.pallas_call(
        _lvt_resident_kernel,
        out_shape=jax.ShapeDtypeStruct((Bp, V), out_dtype),
        grid_spec=pltpu.PrefetchScalarGridSpec(
            num_scalar_prefetch=0,
            grid=(Bp // tm,),
            in_specs=[
                pl.BlockSpec((tm, 1), lambda i: (i, 0)),        # per-row action
                pl.BlockSpec((tm, V), lambda i: (i, 0)),        # before rows
                pl.BlockSpec((A, V, V), lambda i: (0, 0, 0),    # DMA'd once
                             **w_spec_kwargs),
            ],
            out_specs=pl.BlockSpec((tm, V), lambda i: (i, 0)),
        ),
        compiler_params=pltpu.CompilerParams(
            dimension_semantics=("parallel",),      # batch tiles independent
            vmem_limit_bytes=vmem_limit_bytes,
        ),
        cost_estimate=cost,
    )(action_col, before, weights)


# ---------------------------------------------------------------------------
# Fallback path (A*V*V too large for VMEM residency): per-row gathered weight,
# rows sorted by action so redundant weight DMAs are skipped, weight tiled in N.
# ---------------------------------------------------------------------------
def _pick_gather_tn(V, w_itemsize, max_block_bytes=8 * 1024 * 1024):
    """Lane-dense N tile dividing V, keeping the double-buffered (V, tn) weight
    block small enough for the default scoped VMEM limit on all generations."""
    if V % 128 != 0:
        return V
    tn = 128
    for cand in (1024, 512, 256, 128):
        if V % cand == 0 and 2 * V * cand * w_itemsize <= max_block_bytes:
            tn = cand
            break
    return min(tn, V)


def _lvt_gather_kernel(act_ref, x_ref, w_ref, out_ref):
    # x_ref: (1, V); w_ref: (1, V, tn) = weights[action[b]][:, n-tile]; out: (1, tn)
    out_ref[...] = jnp.dot(
        x_ref[...], w_ref[0], preferred_element_type=jnp.float32
    ).astype(out_ref.dtype)


def _lvt_gather(before, action, weights, *, out_dtype):
    B, V = before.shape
    w_item = jnp.dtype(weights.dtype).itemsize
    tn = _pick_gather_tn(V, w_item)

    # Sort rows by action: with rows on the innermost grid axis, consecutive
    # steps request the same weight block index and Pallas skips the DMA, so
    # weight HBM traffic drops from B*(V,tn) to (#distinct actions)*(V,tn).
    order = jnp.argsort(action)
    inv_order = jnp.argsort(order)
    before_s = jnp.take(before, order, axis=0)
    action_s = jnp.take(action, order, axis=0)

    # TODO(synk): full MoE-style grouped kernel (group offsets via scalar
    # prefetch, dense (TM, V) @ (V, tn) tiles per action group) would restore
    # full MXU M-utilization in this regime.
    out_s = pl.pallas_call(
        _lvt_gather_kernel,
        out_shape=jax.ShapeDtypeStruct((B, V), out_dtype),
        grid_spec=pltpu.PrefetchScalarGridSpec(
            num_scalar_prefetch=1,                 # sorted actions land in SMEM
            grid=(V // tn, B),                     # rows innermost -> DMA reuse
            in_specs=[
                pl.BlockSpec((1, V), lambda n, b, act: (b, 0)),
                pl.BlockSpec((1, V, tn), lambda n, b, act: (act[b], 0, n)),
            ],
            out_specs=pl.BlockSpec((1, tn), lambda n, b, act: (b, n)),
        ),
        compiler_params=pltpu.CompilerParams(
            dimension_semantics=("parallel", "arbitrary"),
        ),
    )(action_s, before_s, weights)
    return jnp.take(out_s, inv_order, axis=0)


# ---------------------------------------------------------------------------
# Public wrapper (mirrors LinearVectorTransform.forward semantics)
# ---------------------------------------------------------------------------
def linear_vector_transform(before, action, weights, *, block_m=128,
                            compute_dtype=None, force_fallback=False):
    """pred[b] = before[b] @ weights[action[b]]  (matches the PyTorch bmm forward).

    compute_dtype: optional operand dtype for the matmul (e.g. jnp.bfloat16 on
      v6e/v7x: ~2x MXU rate + half the resident-weight VMEM footprint).
      Accumulation stays f32; the output keeps before.dtype.
    """
    B, V = before.shape
    A = weights.shape[0]
    assert weights.shape == (A, V, V)
    out_dtype = before.dtype

    # Clamp so a bad action index can never trigger an OOB HBM DMA.
    # (PyTorch index_select would raise instead -- deliberate difference.)
    action = jnp.clip(action.astype(jnp.int32), 0, A - 1)

    if compute_dtype is not None:
        before_c = before.astype(compute_dtype)
        weights_c = weights.astype(compute_dtype)
    else:
        before_c, weights_c = before, weights

    w_item = jnp.dtype(weights_c.dtype).itemsize
    x_item = jnp.dtype(before_c.dtype).itemsize
    o_item = jnp.dtype(out_dtype).itemsize

    # Batch tile: multiple of 8 sublanes, at most block_m (128 = MXU M pass).
    tm = min(block_m, _round_up(B, 8))
    Bp = _round_up(B, tm)

    # Generation-aware residency check (per-TensorCore; on v7x the weights are
    # replicated in each TC's VMEM when the batch axis is megacore-parallel,
    # so per-TC capacity is the binding limit).
    cap = _vmem_capacity_bytes()
    weights_bytes = A * V * V * w_item
    io_bytes = 2 * tm * V * (x_item + o_item) + 2 * tm * 4   # double-buffered tiles
    reserve = 4 * 1024 * 1024                                # compiler scratch headroom

    fits_single = weights_bytes + io_bytes + reserve <= cap
    fits_double = 2 * weights_bytes + io_bytes + reserve <= cap

    if force_fallback or not fits_single:
        return _lvt_gather(before_c, action, weights_c, out_dtype=out_dtype)

    # Pad batch to a whole number of (tm, V) tiles (padded rows are zero and
    # get action 0; they produce zeros and are sliced off).
    action_col = action.reshape(B, 1)
    if Bp != B:
        before_c = jnp.pad(before_c, ((0, Bp - B), (0, 0)))
        action_col = jnp.pad(action_col, ((0, Bp - B), (0, 0)))

    def run(single_buffer):
        nbuf = 1 if single_buffer else 2
        needed = nbuf * weights_bytes + io_bytes + reserve
        vmem_limit = int(min(cap, max(needed, 32 * 1024 * 1024)))
        return _lvt_resident(before_c, action_col, weights_c,
                             out_dtype=out_dtype, tm=tm,
                             single_buffer_weights=single_buffer,
                             vmem_limit_bytes=vmem_limit)

    try:
        out = run(single_buffer=True)
    except Exception:
        # pl.Buffered(1) rejected by this JAX build / lowering: retry with the
        # default double-buffered weight block if it still fits, else gather.
        if fits_double:
            out = run(single_buffer=False)
        else:
            return _lvt_gather(before_c, action, weights_c, out_dtype=out_dtype)

    return out[:B] if Bp != B else out


def forward(before, action, weights, after=None, negatives=None):
    """Mirrors LinearVectorTransform.forward: returns (before, pred, after, negatives)."""
    pred = linear_vector_transform(before, action, weights)
    return before, pred, after, negatives


if __name__ == "__main__":
    # Small deterministic setup consistent with the module:
    #   nr_actions = 8, vec_size = 128, batch = 4
    key = jax.random.PRNGKey(0)
    k_w, k_b, k_a, k_after, k_neg = jax.random.split(key, 5)

    nr_actions = 8
    vec_size = 128
    batch = 4

    weights = jax.random.uniform(
        k_w, (nr_actions, vec_size, vec_size), dtype=jnp.float32,
        minval=-1.0 / jnp.sqrt(vec_size), maxval=1.0 / jnp.sqrt(vec_size),
    )
    before = jax.random.normal(k_b, (batch, vec_size), dtype=jnp.float32)
    action = jax.random.randint(k_a, (batch,), 0, nr_actions, dtype=jnp.int32)
    after = jax.random.normal(k_after, (batch, vec_size), dtype=jnp.float32)
    negatives = jax.random.normal(k_neg, (batch, 3, vec_size), dtype=jnp.float32)

    # Reference (plain-JAX semantics of the PyTorch bmm + index_select).
    ref = jnp.einsum("bk,bkj->bj", before, weights[action])

    # 1) Default resident path (f32).
    b_out, pred, a_out, n_out = forward(before, action, weights, after, negatives)
    pred = jax.block_until_ready(pred)
    assert pred.shape == (batch, vec_size)
    assert jnp.allclose(pred, ref, atol=1e-5, rtol=1e-5)

    # 2) bf16-compute resident path (f32 accumulation) -- looser tolerance.
    pred_bf16 = linear_vector_transform(before, action, weights,
                                        compute_dtype=jnp.bfloat16)
    pred_bf16 = jax.block_until_ready(pred_bf16)
    assert jnp.allclose(pred_bf16, ref, atol=5e-2, rtol=5e-2)

    # 3) Gathered (sorted-by-action) fallback path, forced for coverage.
    pred_fb = linear_vector_transform(before, action, weights,
                                      force_fallback=True)
    pred_fb = jax.block_until_ready(pred_fb)
    assert jnp.allclose(pred_fb, ref, atol=1e-5, rtol=1e-5)

    print("KERNEL_OK")
</pallas_src>

<mosaic_0001>
module attributes {stable_mosaic.version = 11 : i64} {
  func.func @_lvt_resident_kernel(%arg0: i32, %arg1: memref<8x1xi32, #tpu.memory_space<vmem>>, %arg2: memref<8x128xf32, #tpu.memory_space<vmem>>, %arg3: memref<8x128x128xf32, #tpu.memory_space<vmem>>, %arg4: memref<8x128xf32, #tpu.memory_space<vmem>>) attributes {dimension_semantics = [#tpu.dimension_semantics<parallel>], iteration_bounds = array<i64: 1>, scalar_prefetch = 0 : i64, scratch_operands = 0 : i64, tpu.core_type = #tpu.core_type<tc>, window_params = [{transform_indices = @transform_0, window_bounds = array<i64: 8, 1>}, {transform_indices = @transform_1, window_bounds = array<i64: 8, 128>}, {pipeline_mode = #tpu.pipeline_mode<synchronous>, transform_indices = @transform_2, window_bounds = array<i64: 8, 128, 128>}, {transform_indices = @transform_3, window_bounds = array<i64: 8, 128>}]} {
    %c0 = arith.constant 0 : index
    %c0_0 = arith.constant 0 : index
    %0 = vector.load %arg2[%c0, %c0_0] : memref<8x128xf32, #tpu.memory_space<vmem>>, vector<8x128xf32>
    %c0_1 = arith.constant 0 : index
    %c0_2 = arith.constant 0 : index
    %1 = vector.load %arg1[%c0_1, %c0_2] : memref<8x1xi32, #tpu.memory_space<vmem>>, vector<8x1xi32>
    %cst = arith.constant 0.000000e+00 : f32
    %2 = vector.broadcast %cst : f32 to vector<8x128xf32>
    %c0_i32 = arith.constant 0 : i32
    %3 = vector.broadcast %c0_i32 : i32 to vector<8x1xi32>
    %4 = arith.cmpi eq, %1, %3 : vector<8x1xi32>
    %cst_3 = arith.constant 0.000000e+00 : f32
    %5 = vector.broadcast %cst_3 : f32 to vector<8x128xf32>
    %6 = vector.shape_cast %4 : vector<8x1xi1> to vector<8x1xi1>
    %7 = vector.broadcast %6 : vector<8x1xi1> to vector<8x128xi1>
    %8 = arith.select %7, %0, %5 : vector<8x128xi1>, vector<8x128xf32>
    %c0_4 = arith.constant 0 : index
    %c0_5 = arith.constant 0 : index
    %c0_6 = arith.constant 0 : index
    %9 = vector.load %arg3[%c0_4, %c0_5, %c0_6] : memref<8x128x128xf32, #tpu.memory_space<vmem>>, vector<1x128x128xf32>
    %10 = vector.shape_cast %9 : vector<1x128x128xf32> to vector<128x128xf32>
    %cst_7 = arith.constant dense<0.000000e+00> : vector<8x128xf32>
    %11 = tpu.matmul %8, %10, %cst_7 {dimension_numbers = #tpu.dot_dimension_numbers<[1], [0], [0], [1], [0, 0, 1, 1], [], []>} : vector<8x128xf32>, vector<128x128xf32>, vector<8x128xf32> -> vector<8x128xf32>
    %12 = arith.addf %2, %11 : vector<8x128xf32>
    %c1_i32 = arith.constant 1 : i32
    %13 = vector.broadcast %c1_i32 : i32 to vector<8x1xi32>
    %14 = arith.cmpi eq, %1, %13 : vector<8x1xi32>
    %cst_8 = arith.constant 0.000000e+00 : f32
    %15 = vector.broadcast %cst_8 : f32 to vector<8x128xf32>
    %16 = vector.shape_cast %14 : vector<8x1xi1> to vector<8x1xi1>
    %17 = vector.broadcast %16 : vector<8x1xi1> to vector<8x128xi1>
    %18 = arith.select %17, %0, %15 : vector<8x128xi1>, vector<8x128xf32>
    %c1 = arith.constant 1 : index
    %c0_9 = arith.constant 0 : index
    %c0_10 = arith.constant 0 : index
    %19 = vector.load %arg3[%c1, %c0_9, %c0_10] : memref<8x128x128xf32, #tpu.memory_space<vmem>>, vector<1x128x128xf32>
    %20 = vector.shape_cast %19 : vector<1x128x128xf32> to vector<128x128xf32>
    %cst_11 = arith.constant dense<0.000000e+00> : vector<8x128xf32>
    %21 = tpu.matmul %18, %20, %cst_11 {dimension_numbers = #tpu.dot_dimension_numbers<[1], [0], [0], [1], [0, 0, 1, 1], [], []>} : vector<8x128xf32>, vector<128x128xf32>, vector<8x128xf32> -> vector<8x128xf32>
    %22 = arith.addf %12, %21 : vector<8x128xf32>
    %c2_i32 = arith.constant 2 : i32
    %23 = vector.broadcast %c2_i32 : i32 to vector<8x1xi32>
    %24 = arith.cmpi eq, %1, %23 : vector<8x1xi32>
    %cst_12 = arith.constant 0.000000e+00 : f32
    %25 = vector.broadcast %cst_12 : f32 to vector<8x128xf32>
    %26 = vector.shape_cast %24 : vector<8x1xi1> to vector<8x1xi1>
    %27 = vector.broadcast %26 : vector<8x1xi1> to vector<8x128xi1>
    %28 = arith.select %27, %0, %25 : vector<8x128xi1>, vector<8x128xf32>
    %c2 = arith.constant 2 : index
    %c0_13 = arith.constant 0 : index
    %c0_14 = arith.constant 0 : index
    %29 = vector.load %arg3[%c2, %c0_13, %c0_14] : memref<8x128x128xf32, #tpu.memory_space<vmem>>, vector<1x128x128xf32>
    %30 = vector.shape_cast %29 : vector<1x128x128xf32> to vector<128x128xf32>
    %cst_15 = arith.constant dense<0.000000e+00> : vector<8x128xf32>
    %31 = tpu.matmul %28, %30, %cst_15 {dimension_numbers = #tpu.dot_dimension_numbers<[1], [0], [0], [1], [0, 0, 1, 1], [], []>} : vector<8x128xf32>, vector<128x128xf32>, vector<8x128xf32> -> vector<8x128xf32>
    %32 = arith.addf %22, %31 : vector<8x128xf32>
    %c3_i32 = arith.constant 3 : i32
    %33 = vector.broadcast %c3_i32 : i32 to vector<8x1xi32>
    %34 = arith.cmpi eq, %1, %33 : vector<8x1xi32>
    %cst_16 = arith.constant 0.000000e+00 : f32
    %35 = vector.broadcast %cst_16 : f32 to vector<8x128xf32>
    %36 = vector.shape_cast %34 : vector<8x1xi1> to vector<8x1xi1>
    %37 = vector.broadcast %36 : vector<8x1xi1> to vector<8x128xi1>
    %38 = arith.select %37, %0, %35 : vector<8x128xi1>, vector<8x128xf32>
    %c3 = arith.constant 3 : index
    %c0_17 = arith.constant 0 : index
    %c0_18 = arith.constant 0 : index
    %39 = vector.load %arg3[%c3, %c0_17, %c0_18] : memref<8x128x128xf32, #tpu.memory_space<vmem>>, vector<1x128x128xf32>
    %40 = vector.shape_cast %39 : vector<1x128x128xf32> to vector<128x128xf32>
    %cst_19 = arith.constant dense<0.000000e+00> : vector<8x128xf32>
    %41 = tpu.matmul %38, %40, %cst_19 {dimension_numbers = #tpu.dot_dimension_numbers<[1], [0], [0], [1], [0, 0, 1, 1], [], []>} : vector<8x128xf32>, vector<128x128xf32>, vector<8x128xf32> -> vector<8x128xf32>
    %42 = arith.addf %32, %41 : vector<8x128xf32>
    %c4_i32 = arith.constant 4 : i32
    %43 = vector.broadcast %c4_i32 : i32 to vector<8x1xi32>
    %44 = arith.cmpi eq, %1, %43 : vector<8x1xi32>
    %cst_20 = arith.constant 0.000000e+00 : f32
    %45 = vector.broadcast %cst_20 : f32 to vector<8x128xf32>
    %46 = vector.shape_cast %44 : vector<8x1xi1> to vector<8x1xi1>
    %47 = vector.broadcast %46 : vector<8x1xi1> to vector<8x128xi1>
    %48 = arith.select %47, %0, %45 : vector<8x128xi1>, vector<8x128xf32>
    %c4 = arith.constant 4 : index
    %c0_21 = arith.constant 0 : index
    %c0_22 = arith.constant 0 : index
    %49 = vector.load %arg3[%c4, %c0_21, %c0_22] : memref<8x128x128xf32, #tpu.memory_space<vmem>>, vector<1x128x128xf32>
    %50 = vector.shape_cast %49 : vector<1x128x128xf32> to vector<128x128xf32>
    %cst_23 = arith.constant dense<0.000000e+00> : vector<8x128xf32>
    %51 = tpu.matmul %48, %50, %cst_23 {dimension_numbers = #tpu.dot_dimension_numbers<[1], [0], [0], [1], [0, 0, 1, 1], [], []>} : vector<8x128xf32>, vector<128x128xf32>, vector<8x128xf32> -> vector<8x128xf32>
    %52 = arith.addf %42, %51 : vector<8x128xf32>
    %c5_i32 = arith.constant 5 : i32
    %53 = vector.broadcast %c5_i32 : i32 to vector<8x1xi32>
    %54 = arith.cmpi eq, %1, %53 : vector<8x1xi32>
    %cst_24 = arith.constant 0.000000e+00 : f32
    %55 = vector.broadcast %cst_24 : f32 to vector<8x128xf32>
    %56 = vector.shape_cast %54 : vector<8x1xi1> to vector<8x1xi1>
    %57 = vector.broadcast %56 : vector<8x1xi1> to vector<8x128xi1>
    %58 = arith.select %57, %0, %55 : vector<8x128xi1>, vector<8x128xf32>
    %c5 = arith.constant 5 : index
    %c0_25 = arith.constant 0 : index
    %c0_26 = arith.constant 0 : index
    %59 = vector.load %arg3[%c5, %c0_25, %c0_26] : memref<8x128x128xf32, #tpu.memory_space<vmem>>, vector<1x128x128xf32>
    %60 = vector.shape_cast %59 : vector<1x128x128xf32> to vector<128x128xf32>
    %cst_27 = arith.constant dense<0.000000e+00> : vector<8x128xf32>
    %61 = tpu.matmul %58, %60, %cst_27 {dimension_numbers = #tpu.dot_dimension_numbers<[1], [0], [0], [1], [0, 0, 1, 1], [], []>} : vector<8x128xf32>, vector<128x128xf32>, vector<8x128xf32> -> vector<8x128xf32>
    %62 = arith.addf %52, %61 : vector<8x128xf32>
    %c6_i32 = arith.constant 6 : i32
    %63 = vector.broadcast %c6_i32 : i32 to vector<8x1xi32>
    %64 = arith.cmpi eq, %1, %63 : vector<8x1xi32>
    %cst_28 = arith.constant 0.000000e+00 : f32
    %65 = vector.broadcast %cst_28 : f32 to vector<8x128xf32>
    %66 = vector.shape_cast %64 : vector<8x1xi1> to vector<8x1xi1>
    %67 = vector.broadcast %66 : vector<8x1xi1> to vector<8x128xi1>
    %68 = arith.select %67, %0, %65 : vector<8x128xi1>, vector<8x128xf32>
    %c6 = arith.constant 6 : index
    %c0_29 = arith.constant 0 : index
    %c0_30 = arith.constant 0 : index
    %69 = vector.load %arg3[%c6, %c0_29, %c0_30] : memref<8x128x128xf32, #tpu.memory_space<vmem>>, vector<1x128x128xf32>
    %70 = vector.shape_cast %69 : vector<1x128x128xf32> to vector<128x128xf32>
    %cst_31 = arith.constant dense<0.000000e+00> : vector<8x128xf32>
    %71 = tpu.matmul %68, %70, %cst_31 {dimension_numbers = #tpu.dot_dimension_numbers<[1], [0], [0], [1], [0, 0, 1, 1], [], []>} : vector<8x128xf32>, vector<128x128xf32>, vector<8x128xf32> -> vector<8x128xf32>
    %72 = arith.addf %62, %71 : vector<8x128xf32>
    %c7_i32 = arith.constant 7 : i32
    %73 = vector.broadcast %c7_i32 : i32 to vector<8x1xi32>
    %74 = arith.cmpi eq, %1, %73 : vector<8x1xi32>
    %cst_32 = arith.constant 0.000000e+00 : f32
    %75 = vector.broadcast %cst_32 : f32 to vector<8x128xf32>
    %76 = vector.shape_cast %74 : vector<8x1xi1> to vector<8x1xi1>
    %77 = vector.broadcast %76 : vector<8x1xi1> to vector<8x128xi1>
    %78 = arith.select %77, %0, %75 : vector<8x128xi1>, vector<8x128xf32>
    %c7 = arith.constant 7 : index
    %c0_33 = arith.constant 0 : index
    %c0_34 = arith.constant 0 : index
    %79 = vector.load %arg3[%c7, %c0_33, %c0_34] : memref<8x128x128xf32, #tpu.memory_space<vmem>>, vector<1x128x128xf32>
    %80 = vector.shape_cast %79 : vector<1x128x128xf32> to vector<128x128xf32>
    %cst_35 = arith.constant dense<0.000000e+00> : vector<8x128xf32>
    %81 = tpu.matmul %78, %80, %cst_35 {dimension_numbers = #tpu.dot_dimension_numbers<[1], [0], [0], [1], [0, 0, 1, 1], [], []>} : vector<8x128xf32>, vector<128x128xf32>, vector<8x128xf32> -> vector<8x128xf32>
    %82 = arith.addf %72, %81 : vector<8x128xf32>
    %c0_36 = arith.constant 0 : index
    %c0_37 = arith.constant 0 : index
    %83 = vector.load %arg4[%c0_36, %c0_37] : memref<8x128xf32, #tpu.memory_space<vmem>>, vector<8x128xf32>
    tpu.vector_store %arg4[%c0_36, %c0_37], %82 {strides = array<i32>} : memref<8x128xf32, #tpu.memory_space<vmem>>, vector<8x128xf32>,
    return
  }
  func.func @transform_0(%arg0: i32) -> (i32, i32) {
    %c0_i32 = arith.constant 0 : i32
    %c0_i32_0 = arith.constant 0 : i32
    return %arg0, %c0_i32 : i32, i32
  }
  func.func @transform_1(%arg0: i32) -> (i32, i32) {
    %c0_i32 = arith.constant 0 : i32
    %c0_i32_0 = arith.constant 0 : i32
    return %arg0, %c0_i32 : i32, i32
  }
  func.func @transform_2(%arg0: i32) -> (i32, i32, i32) {
    %c0_i32 = arith.constant 0 : i32
    %c0_i32_0 = arith.constant 0 : i32
    %c0_i32_1 = arith.constant 0 : i32
    %c0_i32_2 = arith.constant 0 : i32
    return %c0_i32, %c0_i32_0, %c0_i32_1 : i32, i32, i32
  }
  func.func @transform_3(%arg0: i32) -> (i32, i32) {
    %c0_i32 = arith.constant 0 : i32
    %c0_i32_0 = arith.constant 0 : i32
    return %arg0, %c0_i32 : i32, i32
  }
}

module attributes {stable_mosaic.version = 11 : i64} {
  func.func @_lvt_resident_kernel(%arg0: i32, %arg1: memref<8x1xi32, #tpu.memory_space<vmem>>, %arg2: memref<8x128xf32, #tpu.memory_space<vmem>>, %arg3: memref<8x128x128xf32, #tpu.memory_space<vmem>>, %arg4: memref<8x128xf32, #tpu.memory_space<vmem>>) attributes {dimension_semantics = [#tpu.dimension_semantics<parallel>], iteration_bounds = array<i64: 1>, scalar_prefetch = 0 : i64, scratch_operands = 0 : i64, tpu.core_type = #tpu.core_type<tc>, window_params = [{transform_indices = @transform_0, window_bounds = array<i64: 8, 1>}, {transform_indices = @transform_1, window_bounds = array<i64: 8, 128>}, {pipeline_mode = #tpu.pipeline_mode<synchronous>, transform_indices = @transform_2, window_bounds = array<i64: 8, 128, 128>}, {transform_indices = @transform_3, window_bounds = array<i64: 8, 128>}]} {
    %c0 = arith.constant 0 : index
    %c0_0 = arith.constant 0 : index
    %0 = vector.load %arg2[%c0, %c0_0] : memref<8x128xf32, #tpu.memory_space<vmem>>, vector<8x128xf32>
    %c0_1 = arith.constant 0 : index
    %c0_2 = arith.constant 0 : index
    %1 = vector.load %arg1[%c0_1, %c0_2] : memref<8x1xi32, #tpu.memory_space<vmem>>, vector<8x1xi32>
    %cst = arith.constant 0.000000e+00 : f32
    %2 = vector.broadcast %cst : f32 to vector<8x128xf32>
    %c0_i32 = arith.constant 0 : i32
    %3 = vector.broadcast %c0_i32 : i32 to vector<8x1xi32>
    %4 = arith.cmpi eq, %1, %3 : vector<8x1xi32>
    %cst_3 = arith.constant 0.000000e+00 : f32
    %5 = vector.broadcast %cst_3 : f32 to vector<8x128xf32>
    %6 = vector.shape_cast %4 : vector<8x1xi1> to vector<8x1xi1>
    %7 = vector.broadcast %6 : vector<8x1xi1> to vector<8x128xi1>
    %8 = arith.select %7, %0, %5 : vector<8x128xi1>, vector<8x128xf32>
    %c0_4 = arith.constant 0 : index
    %c0_5 = arith.constant 0 : index
    %c0_6 = arith.constant 0 : index
    %9 = vector.load %arg3[%c0_4, %c0_5, %c0_6] : memref<8x128x128xf32, #tpu.memory_space<vmem>>, vector<1x128x128xf32>
    %10 = vector.shape_cast %9 : vector<1x128x128xf32> to vector<128x128xf32>
    %cst_7 = arith.constant dense<0.000000e+00> : vector<8x128xf32>
    %11 = tpu.matmul %8, %10, %cst_7 {dimension_numbers = #tpu.dot_dimension_numbers<[1], [0], [0], [1], [0, 0, 1, 1], [], []>} : vector<8x128xf32>, vector<128x128xf32>, vector<8x128xf32> -> vector<8x128xf32>
    %12 = arith.addf %2, %11 : vector<8x128xf32>
    %c1_i32 = arith.constant 1 : i32
    %13 = vector.broadcast %c1_i32 : i32 to vector<8x1xi32>
    %14 = arith.cmpi eq, %1, %13 : vector<8x1xi32>
    %cst_8 = arith.constant 0.000000e+00 : f32
    %15 = vector.broadcast %cst_8 : f32 to vector<8x128xf32>
    %16 = vector.shape_cast %14 : vector<8x1xi1> to vector<8x1xi1>
    %17 = vector.broadcast %16 : vector<8x1xi1> to vector<8x128xi1>
    %18 = arith.select %17, %0, %15 : vector<8x128xi1>, vector<8x128xf32>
    %c1 = arith.constant 1 : index
    %c0_9 = arith.constant 0 : index
    %c0_10 = arith.constant 0 : index
    %19 = vector.load %arg3[%c1, %c0_9, %c0_10] : memref<8x128x128xf32, #tpu.memory_space<vmem>>, vector<1x128x128xf32>
    %20 = vector.shape_cast %19 : vector<1x128x128xf32> to vector<128x128xf32>
    %cst_11 = arith.constant dense<0.000000e+00> : vector<8x128xf32>
    %21 = tpu.matmul %18, %20, %cst_11 {dimension_numbers = #tpu.dot_dimension_numbers<[1], [0], [0], [1], [0, 0, 1, 1], [], []>} : vector<8x128xf32>, vector<128x128xf32>, vector<8x128xf32> -> vector<8x128xf32>
    %22 = arith.addf %12, %21 : vector<8x128xf32>
    %c2_i32 = arith.constant 2 : i32
    %23 = vector.broadcast %c2_i32 : i32 to vector<8x1xi32>
    %24 = arith.cmpi eq, %1, %23 : vector<8x1xi32>
    %cst_12 = arith.constant 0.000000e+00 : f32
    %25 = vector.broadcast %cst_12 : f32 to vector<8x128xf32>
    %26 = vector.shape_cast %24 : vector<8x1xi1> to vector<8x1xi1>
    %27 = vector.broadcast %26 : vector<8x1xi1> to vector<8x128xi1>
    %28 = arith.select %27, %0, %25 : vector<8x128xi1>, vector<8x128xf32>
    %c2 = arith.constant 2 : index
    %c0_13 = arith.constant 0 : index
    %c0_14 = arith.constant 0 : index
    %29 = vector.load %arg3[%c2, %c0_13, %c0_14] : memref<8x128x128xf32, #tpu.memory_space<vmem>>, vector<1x128x128xf32>
    %30 = vector.shape_cast %29 : vector<1x128x128xf32> to vector<128x128xf32>
    %cst_15 = arith.constant dense<0.000000e+00> : vector<8x128xf32>
    %31 = tpu.matmul %28, %30, %cst_15 {dimension_numbers = #tpu.dot_dimension_numbers<[1], [0], [0], [1], [0, 0, 1, 1], [], []>} : vector<8x128xf32>, vector<128x128xf32>, vector<8x128xf32> -> vector<8x128xf32>
    %32 = arith.addf %22, %31 : vector<8x128xf32>
    %c3_i32 = arith.constant 3 : i32
    %33 = vector.broadcast %c3_i32 : i32 to vector<8x1xi32>
    %34 = arith.cmpi eq, %1, %33 : vector<8x1xi32>
    %cst_16 = arith.constant 0.000000e+00 : f32
    %35 = vector.broadcast %cst_16 : f32 to vector<8x128xf32>
    %36 = vector.shape_cast %34 : vector<8x1xi1> to vector<8x1xi1>
    %37 = vector.broadcast %36 : vector<8x1xi1> to vector<8x128xi1>
    %38 = arith.select %37, %0, %35 : vector<8x128xi1>, vector<8x128xf32>
    %c3 = arith.constant 3 : index
    %c0_17 = arith.constant 0 : index
    %c0_18 = arith.constant 0 : index
    %39 = vector.load %arg3[%c3, %c0_17, %c0_18] : memref<8x128x128xf32, #tpu.memory_space<vmem>>, vector<1x128x128xf32>
    %40 = vector.shape_cast %39 : vector<1x128x128xf32> to vector<128x128xf32>
    %cst_19 = arith.constant dense<0.000000e+00> : vector<8x128xf32>
    %41 = tpu.matmul %38, %40, %cst_19 {dimension_numbers = #tpu.dot_dimension_numbers<[1], [0], [0], [1], [0, 0, 1, 1], [], []>} : vector<8x128xf32>, vector<128x128xf32>, vector<8x128xf32> -> vector<8x128xf32>
    %42 = arith.addf %32, %41 : vector<8x128xf32>
    %c4_i32 = arith.constant 4 : i32
    %43 = vector.broadcast %c4_i32 : i32 to vector<8x1xi32>
    %44 = arith.cmpi eq, %1, %43 : vector<8x1xi32>
    %cst_20 = arith.constant 0.000000e+00 : f32
    %45 = vector.broadcast %cst_20 : f32 to vector<8x128xf32>
    %46 = vector.shape_cast %44 : vector<8x1xi1> to vector<8x1xi1>
    %47 = vector.broadcast %46 : vector<8x1xi1> to vector<8x128xi1>
    %48 = arith.select %47, %0, %45 : vector<8x128xi1>, vector<8x128xf32>
    %c4 = arith.constant 4 : index
    %c0_21 = arith.constant 0 : index
    %c0_22 = arith.constant 0 : index
    %49 = vector.load %arg3[%c4, %c0_21, %c0_22] : memref<8x128x128xf32, #tpu.memory_space<vmem>>, vector<1x128x128xf32>
    %50 = vector.shape_cast %49 : vector<1x128x128xf32> to vector<128x128xf32>
    %cst_23 = arith.constant dense<0.000000e+00> : vector<8x128xf32>
    %51 = tpu.matmul %48, %50, %cst_23 {dimension_numbers = #tpu.dot_dimension_numbers<[1], [0], [0], [1], [0, 0, 1, 1], [], []>} : vector<8x128xf32>, vector<128x128xf32>, vector<8x128xf32> -> vector<8x128xf32>
    %52 = arith.addf %42, %51 : vector<8x128xf32>
    %c5_i32 = arith.constant 5 : i32
    %53 = vector.broadcast %c5_i32 : i32 to vector<8x1xi32>
    %54 = arith.cmpi eq, %1, %53 : vector<8x1xi32>
    %cst_24 = arith.constant 0.000000e+00 : f32
    %55 = vector.broadcast %cst_24 : f32 to vector<8x128xf32>
    %56 = vector.shape_cast %54 : vector<8x1xi1> to vector<8x1xi1>
    %57 = vector.broadcast %56 : vector<8x1xi1> to vector<8x128xi1>
    %58 = arith.select %57, %0, %55 : vector<8x128xi1>, vector<8x128xf32>
    %c5 = arith.constant 5 : index
    %c0_25 = arith.constant 0 : index
    %c0_26 = arith.constant 0 : index
    %59 = vector.load %arg3[%c5, %c0_25, %c0_26] : memref<8x128x128xf32, #tpu.memory_space<vmem>>, vector<1x128x128xf32>
    %60 = vector.shape_cast %59 : vector<1x128x128xf32> to vector<128x128xf32>
    %cst_27 = arith.constant dense<0.000000e+00> : vector<8x128xf32>
    %61 = tpu.matmul %58, %60, %cst_27 {dimension_numbers = #tpu.dot_dimension_numbers<[1], [0], [0], [1], [0, 0, 1, 1], [], []>} : vector<8x128xf32>, vector<128x128xf32>, vector<8x128xf32> -> vector<8x128xf32>
    %62 = arith.addf %52, %61 : vector<8x128xf32>
    %c6_i32 = arith.constant 6 : i32
    %63 = vector.broadcast %c6_i32 : i32 to vector<8x1xi32>
    %64 = arith.cmpi eq, %1, %63 : vector<8x1xi32>
    %cst_28 = arith.constant 0.000000e+00 : f32
    %65 = vector.broadcast %cst_28 : f32 to vector<8x128xf32>
    %66 = vector.shape_cast %64 : vector<8x1xi1> to vector<8x1xi1>
    %67 = vector.broadcast %66 : vector<8x1xi1> to vector<8x128xi1>
    %68 = arith.select %67, %0, %65 : vector<8x128xi1>, vector<8x128xf32>
    %c6 = arith.constant 6 : index
    %c0_29 = arith.constant 0 : index
    %c0_30 = arith.constant 0 : index
    %69 = vector.load %arg3[%c6, %c0_29, %c0_30] : memref<8x128x128xf32, #tpu.memory_space<vmem>>, vector<1x128x128xf32>
    %70 = vector.shape_cast %69 : vector<1x128x128xf32> to vector<128x128xf32>
    %cst_31 = arith.constant dense<0.000000e+00> : vector<8x128xf32>
    %71 = tpu.matmul %68, %70, %cst_31 {dimension_numbers = #tpu.dot_dimension_numbers<[1], [0], [0], [1], [0, 0, 1, 1], [], []>} : vector<8x128xf32>, vector<128x128xf32>, vector<8x128xf32> -> vector<8x128xf32>
    %72 = arith.addf %62, %71 : vector<8x128xf32>
    %c7_i32 = arith.constant 7 : i32
    %73 = vector.broadcast %c7_i32 : i32 to vector<8x1xi32>
    %74 = arith.cmpi eq, %1, %73 : vector<8x1xi32>
    %cst_32 = arith.constant 0.000000e+00 : f32
    %75 = vector.broadcast %cst_32 : f32 to vector<8x128xf32>
    %76 = vector.shape_cast %74 : vector<8x1xi1> to vector<8x1xi1>
    %77 = vector.broadcast %76 : vector<8x1xi1> to vector<8x128xi1>
    %78 = arith.select %77, %0, %75 : vector<8x128xi1>, vector<8x128xf32>
    %c7 = arith.constant 7 : index
    %c0_33 = arith.constant 0 : index
    %c0_34 = arith.constant 0 : index
    %79 = vector.load %arg3[%c7, %c0_33, %c0_34] : memref<8x128x128xf32, #tpu.memory_space<vmem>>, vector<1x128x128xf32>
    %80 = vector.shape_cast %79 : vector<1x128x128xf32> to vector<128x128xf32>
    %cst_35 = arith.constant dense<0.000000e+00> : vector<8x128xf32>
    %81 = tpu.matmul %78, %80, %cst_35 {dimension_numbers = #tpu.dot_dimension_numbers<[1], [0], [0], [1], [0, 0, 1, 1], [], []>} : vector<8x128xf32>, vector<128x128xf32>, vector<8x128xf32> -> vector<8x128xf32>
    %82 = arith.addf %72, %81 : vector<8x128xf32>
    %c0_36 = arith.constant 0 : index
    %c0_37 = arith.constant 0 : index
    %83 = vector.load %arg4[%c0_36, %c0_37] : memref<8x128xf32, #tpu.memory_space<vmem>>, vector<8x128xf32>
    tpu.vector_store %arg4[%c0_36, %c0_37], %82 {strides = array<i32>} : memref<8x128xf32, #tpu.memory_space<vmem>>, vector<8x128xf32>,
    return
  }
  func.func @transform_0(%arg0: i32) -> (i32, i32) {
    %c0_i32 = arith.constant 0 : i32
    %c0_i32_0 = arith.constant 0 : i32
    return %arg0, %c0_i32 : i32, i32
  }
  func.func @transform_1(%arg0: i32) -> (i32, i32) {
    %c0_i32 = arith.constant 0 : i32
    %c0_i32_0 = arith.constant 0 : i32
    return %arg0, %c0_i32 : i32, i32
  }
  func.func @transform_2(%arg0: i32) -> (i32, i32, i32) {
    %c0_i32 = arith.constant 0 : i32
    %c0_i32_0 = arith.constant 0 : i32
    %c0_i32_1 = arith.constant 0 : i32
    %c0_i32_2 = arith.constant 0 : i32
    return %c0_i32, %c0_i32_0, %c0_i32_1 : i32, i32, i32
  }
  func.func @transform_3(%arg0: i32) -> (i32, i32) {
    %c0_i32 = arith.constant 0 : i32
    %c0_i32_0 = arith.constant 0 : i32
    return %arg0, %c0_i32 : i32, i32
  }
}

</mosaic_0001>

<llo_original>
// kernel: tpu_custom_call.1
$region0: #{tpu_custom_call.1}
  #allocation0 [shape = 'u32[]', space=smem, size = 0x4, offset = 0x4, fixed_abs, tag = 'smem constant byte address 0x4 - core index']
  #allocation1 [shape = 'u32[72,128]{1,0:T(1,128)}', space=vmem, size = 0x9000, scoped, tag = 'internal scratch']
  %s0 = inlined_call_operand.vmem [shape: s32[8,1], index: 0, kind: input, shape index: {}]
  %s1 = inlined_call_operand.vmem [shape: f32[8,128], index: 1, kind: input, shape index: {}]
  %s2 = inlined_call_operand.hbm [shape: f32[8,128,128], index: 2, kind: input, shape index: {}]
  %s3 = inlined_call_operand.hbm [shape: f32[8,128], index: 3, kind: output, shape index: {}]
  %s4 = sld [smem:[#allocation0]]
  $region26: #{tpu_custom_call.1} parent=0
    _
  %s6 = ssub.s32 1, %s4
  %s7 = scalar_select 0, %s6, %s4
  $region1: #{tpu_custom_call.1} parent=0
    #allocation2 [shape = 'u8[524288]{0}', space=vmem, size = 0x80000, scoped, tag = 'input window, operand 2, single buffered']
    #allocation3 [shape = 's32[1]{0}', space=sflag, size = 0x4, scoped, tag = 'scoped memory for tpu_custom_call.1']
    #allocation4 [shape = 's32[1]{0}', space=sflag, size = 0x4, scoped, tag = 'scoped memory for tpu_custom_call.1']
    #allocation5 [shape = 'u8[4096]{0}', space=vmem, size = 0x1000, scoped, tag = 'output window, operand 0, single buffered']
    %8 = vsyncpa [#allocation3], 0
    %9 = vsyncpa [#allocation4], 0
    // Predicated region
    $region2: #{tpu_custom_call.1} parent=1 // pred_check
      _
    $region3: #{tpu_custom_call.1} parent=1 // pred_check_branch
      %11 = sbr.rel (0) target = $region5
    $region4: #{tpu_custom_call.1} parent=1 // pred_region
      _
    $region5: #{tpu_custom_call.1} parent=1 // pred_fallthru
      _
    // Predicated region
    $region6: #{tpu_custom_call.1} parent=1 // pred_check
      _
    $region7: #{tpu_custom_call.1} parent=1 // pred_check_branch
      %13 = sbr.rel (0) target = $region9
    $region8: #{tpu_custom_call.1} parent=1 // pred_region
      _
    $region9: #{tpu_custom_call.1} parent=1 // pred_fallthru
      _
    // Predicated region
    $region10: #{tpu_custom_call.1} parent=1 // pred_check
      _
    $region11: #{tpu_custom_call.1} parent=1 // pred_check_branch
      %15 = sbr.rel (0) target = $region13
    $region12: #{tpu_custom_call.1} parent=1 // pred_region
      %17 = vsyncadd [#allocation3], 0
      %s18 = sshll.u32 %s2, 4
      %s19 = int_to_ptr.hbm [resolvable:$true] %s18
      %s20 = sshll.u32 [#allocation2], 4
      %s21 = int_to_ptr.vmem [resolvable:$true] %s20
      %26 = dma.hbm_to_vmem [thread:$0]  %s19, 16384, %s21, [#allocation3], 128, 128, 8
    $region13: #{tpu_custom_call.1} parent=1 // pred_fallthru
      _
    // Predicated region
    $region14: #{tpu_custom_call.1} parent=1 // pred_check
      _
    $region15: #{tpu_custom_call.1} parent=1 // pred_check_branch
      %28 = sbr.rel (0) target = $region17
    $region16: #{tpu_custom_call.1} parent=1 // pred_region
      %30 = dma.done [#allocation3], 16384
    $region17: #{tpu_custom_call.1} parent=1 // pred_fallthru
      _
    %v31 = vld [vmem:[%s1] sm:$0xff]
    %v32 = vld [vmem:[%s0] sm:$0xff]
    %vm33 = vcmp.eq.s32.totalorder %v32, 0
    %v34 = vsel %vm33, 1, 0
    %35 = vset.pattern.permute.xlu0 0
    %36 = vperm.xlu0 %35, %v34
    %v37 = vpop.permute.xlu0 %36
    %vm38 = vcmp.eq.s32.totalorder %v37, 1
    %v39 = vsel %vm38, %v31, 0.0
    %v40 = vld [vmem:[#allocation2] sm:$0xff]
    %v41 = vld [vmem:[#allocation2 + $0x8] sm:$0xff]
    %v42 = vld [vmem:[#allocation2 + $0x10] sm:$0xff]
    %v43 = vld [vmem:[#allocation2 + $0x18] sm:$0xff]
    %v44 = vld [vmem:[#allocation2 + $0x20] sm:$0xff]
    %v45 = vld [vmem:[#allocation2 + $0x28] sm:$0xff]
    %v46 = vld [vmem:[#allocation2 + $0x30] sm:$0xff]
    %v47 = vld [vmem:[#allocation2 + $0x38] sm:$0xff]
    %v48 = vld [vmem:[#allocation2 + $0x40] sm:$0xff]
    %v49 = vld [vmem:[#allocation2 + $0x48] sm:$0xff]
    %v50 = vld [vmem:[#allocation2 + $0x50] sm:$0xff]
    %v51 = vld [vmem:[#allocation2 + $0x58] sm:$0xff]
    %v52 = vld [vmem:[#allocation2 + $0x60] sm:$0xff]
    %v53 = vld [vmem:[#allocation2 + $0x68] sm:$0xff]
    %v54 = vld [vmem:[#allocation2 + $0x70] sm:$0xff]
    %v55 = vld [vmem:[#allocation2 + $0x78] sm:$0xff]
    %vm56 = vcmp.eq.s32.totalorder %v32, 1
    %v57 = vsel %vm56, 1, 0
    %58 = vset.pattern.permute.xlu0 0
    %59 = vperm.xlu0 %58, %v57
    %v60 = vpop.permute.xlu0 %59
    %vm61 = vcmp.eq.s32.totalorder %v60, 1
    %v62 = vsel %vm61, %v31, 0.0
    %s63 = scalar_lea.vmem [#allocation2], 128
    %v64 = vld [vmem:[%s63] sm:$0xff]
    %v65 = vld [vmem:[%s63 + $0x8] sm:$0xff]
    %v66 = vld [vmem:[%s63 + $0x10] sm:$0xff]
    %v67 = vld [vmem:[%s63 + $0x18] sm:$0xff]
    %v68 = vld [vmem:[%s63 + $0x20] sm:$0xff]
    %v69 = vld [vmem:[%s63 + $0x28] sm:$0xff]
    %v70 = vld [vmem:[%s63 + $0x30] sm:$0xff]
    %v71 = vld [vmem:[%s63 + $0x38] sm:$0xff]
    %v72 = vld [vmem:[%s63 + $0x40] sm:$0xff]
    %v73 = vld [vmem:[%s63 + $0x48] sm:$0xff]
    %v74 = vld [vmem:[%s63 + $0x50] sm:$0xff]
    %v75 = vld [vmem:[%s63 + $0x58] sm:$0xff]
    %v76 = vld [vmem:[%s63 + $0x60] sm:$0xff]
    %v77 = vld [vmem:[%s63 + $0x68] sm:$0xff]
    %v78 = vld [vmem:[%s63 + $0x70] sm:$0xff]
    %v79 = vld [vmem:[%s63 + $0x78] sm:$0xff]
    %80 = vmatpush.msra.mxu0 %v79
    %81 = vmatpush.msra.mxu0 %v78
    %82 = vmatpush.msra.mxu0 %v77
    %83 = vmatpush.msra.mxu0 %v76
    %84 = vmatpush.msra.mxu0 %v75
    %85 = vmatpush.msra.mxu0 %v74
    %86 = vmatpush.msra.mxu0 %v73
    %87 = vmatpush.msra.mxu0 %v72
    %88 = vmatpush.msra.mxu0 %v71
    %89 = vmatpush.msra.mxu0 %v70
    %90 = vmatpush.msra.mxu0 %v69
    %91 = vmatpush.msra.mxu0 %v68
    %92 = vmatpush.msra.mxu0 %v67
    %93 = vmatpush.msra.mxu0 %v66
    %94 = vmatpush.msra.mxu0 %v65
    %95 = vmatpush.msra.mxu0 %v64
    %96 = vmatmul.f32.gmra.mxu0 %v62
    %v97 = vpop.f32.mrf.mxu0
    %v98 = vadd.f32 0.0, %v97
    %99 = vdwg.mxu0
    %100 = vmatpush.msra.mxu0 %v55
    %101 = vmatpush.msra.mxu0 %v54
    %102 = vmatpush.msra.mxu0 %v53
    %103 = vmatpush.msra.mxu0 %v52
    %104 = vmatpush.msra.mxu0 %v51
    %105 = vmatpush.msra.mxu0 %v50
    %106 = vmatpush.msra.mxu0 %v49
    %107 = vmatpush.msra.mxu0 %v48
    %108 = vmatpush.msra.mxu0 %v47
    %109 = vmatpush.msra.mxu0 %v46
    %110 = vmatpush.msra.mxu0 %v45
    %111 = vmatpush.msra.mxu0 %v44
    %112 = vmatpush.msra.mxu0 %v43
    %113 = vmatpush.msra.mxu0 %v42
    %114 = vmatpush.msra.mxu0 %v41
    %115 = vmatpush.msra.mxu0 %v40
    %116 = vmatmul.f32.gmra.mxu0 %v39
    %v117 = vpop.f32.mrf.mxu0
    %v118 = vadd.f32 %v98, %v117
    %119 = vdwg.mxu0
    %vm120 = vcmp.eq.s32.totalorder %v32, 2
    %v121 = vsel %vm120, 1, 0
    %122 = vset.pattern.permute.xlu0 0
    %123 = vperm.xlu0 %122, %v121
    %v124 = vpop.permute.xlu0 %123
    %vm125 = vcmp.eq.s32.totalorder %v124, 1
    %v126 = vsel %vm125, %v31, 0.0
    %s127 = scalar_lea.vmem [#allocation2], 256
    %v128 = vld [vmem:[%s127] sm:$0xff]
    %v129 = vld [vmem:[%s127 + $0x8] sm:$0xff]
    %v130 = vld [vmem:[%s127 + $0x10] sm:$0xff]
    %v131 = vld [vmem:[%s127 + $0x18] sm:$0xff]
    %v132 = vld [vmem:[%s127 + $0x20] sm:$0xff]
    %v133 = vld [vmem:[%s127 + $0x28] sm:$0xff]
    %v134 = vld [vmem:[%s127 + $0x30] sm:$0xff]
    %v135 = vld [vmem:[%s127 + $0x38] sm:$0xff]
    %v136 = vld [vmem:[%s127 + $0x40] sm:$0xff]
    %v137 = vld [vmem:[%s127 + $0x48] sm:$0xff]
    %v138 = vld [vmem:[%s127 + $0x50] sm:$0xff]
    %v139 = vld [vmem:[%s127 + $0x58] sm:$0xff]
    %v140 = vld [vmem:[%s127 + $0x60] sm:$0xff]
    %v141 = vld [vmem:[%s127 + $0x68] sm:$0xff]
    %v142 = vld [vmem:[%s127 + $0x70] sm:$0xff]
    %v143 = vld [vmem:[%s127 + $0x78] sm:$0xff]
    %144 = vmatpush.msra.mxu0 %v143
    %145 = vmatpush.msra.mxu0 %v142
    %146 = vmatpush.msra.mxu0 %v141
    %147 = vmatpush.msra.mxu0 %v140
    %148 = vmatpush.msra.mxu0 %v139
    %149 = vmatpush.msra.mxu0 %v138
    %150 = vmatpush.msra.mxu0 %v137
    %151 = vmatpush.msra.mxu0 %v136
    %152 = vmatpush.msra.mxu0 %v135
    %153 = vmatpush.msra.mxu0 %v134
    %154 = vmatpush.msra.mxu0 %v133
    %155 = vmatpush.msra.mxu0 %v132
    %156 = vmatpush.msra.mxu0 %v131
    %157 = vmatpush.msra.mxu0 %v130
    %158 = vmatpush.msra.mxu0 %v129
    %159 = vmatpush.msra.mxu0 %v128
    %160 = vmatmul.f32.gmra.mxu0 %v126
    %v161 = vpop.f32.mrf.mxu0
    %v162 = vadd.f32 0.0, %v161
    %163 = vdwg.mxu0
    %v164 = vadd.f32 %v118, %v162
    %vm165 = vcmp.eq.s32.totalorder %v32, 3
    %v166 = vsel %vm165, 1, 0
    %167 = vset.pattern.permute.xlu0 0
    %168 = vperm.xlu0 %167, %v166
    %v169 = vpop.permute.xlu0 %168
    %vm170 = vcmp.eq.s32.totalorder %v169, 1
    %v171 = vsel %vm170, %v31, 0.0
    %s172 = scalar_lea.vmem [#allocation2], 384
    %v173 = vld [vmem:[%s172] sm:$0xff]
    %v174 = vld [vmem:[%s172 + $0x8] sm:$0xff]
    %v175 = vld [vmem:[%s172 + $0x10] sm:$0xff]
    %v176 = vld [vmem:[%s172 + $0x18] sm:$0xff]
    %v177 = vld [vmem:[%s172 + $0x20] sm:$0xff]
    %v178 = vld [vmem:[%s172 + $0x28] sm:$0xff]
    %v179 = vld [vmem:[%s172 + $0x30] sm:$0xff]
    %v180 = vld [vmem:[%s172 + $0x38] sm:$0xff]
    %v181 = vld [vmem:[%s172 + $0x40] sm:$0xff]
    %v182 = vld [vmem:[%s172 + $0x48] sm:$0xff]
    %v183 = vld [vmem:[%s172 + $0x50] sm:$0xff]
    %v184 = vld [vmem:[%s172 + $0x58] sm:$0xff]
    %v185 = vld [vmem:[%s172 + $0x60] sm:$0xff]
    %v186 = vld [vmem:[%s172 + $0x68] sm:$0xff]
    %v187 = vld [vmem:[%s172 + $0x70] sm:$0xff]
    %v188 = vld [vmem:[%s172 + $0x78] sm:$0xff]
    %189 = vmatpush.msra.mxu0 %v188
    %190 = vmatpush.msra.mxu0 %v187
    %191 = vmatpush.msra.mxu0 %v186
    %192 = vmatpush.msra.mxu0 %v185
    %193 = vmatpush.msra.mxu0 %v184
    %194 = vmatpush.msra.mxu0 %v183
    %195 = vmatpush.msra.mxu0 %v182
    %196 = vmatpush.msra.mxu0 %v181
    %197 = vmatpush.msra.mxu0 %v180
    %198 = vmatpush.msra.mxu0 %v179
    %199 = vmatpush.msra.mxu0 %v178
    %200 = vmatpush.msra.mxu0 %v177
    %201 = vmatpush.msra.mxu0 %v176
    %202 = vmatpush.msra.mxu0 %v175
    %203 = vmatpush.msra.mxu0 %v174
    %204 = vmatpush.msra.mxu0 %v173
    %205 = vmatmul.f32.gmra.mxu0 %v171
    %v206 = vpop.f32.mrf.mxu0
    %v207 = vadd.f32 0.0, %v206
    %208 = vdwg.mxu0
    %v209 = vadd.f32 %v164, %v207
    %vm210 = vcmp.eq.s32.totalorder %v32, 4
    %v211 = vsel %vm210, 1, 0
    %212 = vset.pattern.permute.xlu0 0
    %213 = vperm.xlu0 %212, %v211
    %v214 = vpop.permute.xlu0 %213
    %vm215 = vcmp.eq.s32.totalorder %v214, 1
    %v216 = vsel %vm215, %v31, 0.0
    %s217 = scalar_lea.vmem [#allocation2], 512
    %v218 = vld [vmem:[%s217] sm:$0xff]
    %v219 = vld [vmem:[%s217 + $0x8] sm:$0xff]
    %v220 = vld [vmem:[%s217 + $0x10] sm:$0xff]
    %v221 = vld [vmem:[%s217 + $0x18] sm:$0xff]
    %v222 = vld [vmem:[%s217 + $0x20] sm:$0xff]
    %v223 = vld [vmem:[%s217 + $0x28] sm:$0xff]
    %v224 = vld [vmem:[%s217 + $0x30] sm:$0xff]
    %v225 = vld [vmem:[%s217 + $0x38] sm:$0xff]
    %v226 = vld [vmem:[%s217 + $0x40] sm:$0xff]
    %v227 = vld [vmem:[%s217 + $0x48] sm:$0xff]
    %v228 = vld [vmem:[%s217 + $0x50] sm:$0xff]
    %v229 = vld [vmem:[%s217 + $0x58] sm:$0xff]
    %v230 = vld [vmem:[%s217 + $0x60] sm:$0xff]
    %v231 = vld [vmem:[%s217 + $0x68] sm:$0xff]
    %v232 = vld [vmem:[%s217 + $0x70] sm:$0xff]
    %v233 = vld [vmem:[%s217 + $0x78] sm:$0xff]
    %234 = vmatpush.msra.mxu0 %v233
    %235 = vmatpush.msra.mxu0 %v232
    %236 = vmatpush.msra.mxu0 %v231
    %237 = vmatpush.msra.mxu0 %v230
    %238 = vmatpush.msra.mxu0 %v229
    %239 = vmatpush.msra.mxu0 %v228
    %240 = vmatpush.msra.mxu0 %v227
    %241 = vmatpush.msra.mxu0 %v226
    %242 = vmatpush.msra.mxu0 %v225
    %243 = vmatpush.msra.mxu0 %v224
    %244 = vmatpush.msra.mxu0 %v223
    %245 = vmatpush.msra.mxu0 %v222
    %246 = vmatpush.msra.mxu0 %v221
    %247 = vmatpush.msra.mxu0 %v220
    %248 = vmatpush.msra.mxu0 %v219
    %249 = vmatpush.msra.mxu0 %v218
    %250 = vmatmul.f32.gmra.mxu0 %v216
    %v251 = vpop.f32.mrf.mxu0
    %v252 = vadd.f32 0.0, %v251
    %253 = vdwg.mxu0
    %v254 = vadd.f32 %v209, %v252
    %vm255 = vcmp.eq.s32.totalorder %v32, 5
    %v256 = vsel %vm255, 1, 0
    %257 = vset.pattern.permute.xlu0 0
    %258 = vperm.xlu0 %257, %v256
    %v259 = vpop.permute.xlu0 %258
    %vm260 = vcmp.eq.s32.totalorder %v259, 1
    %v261 = vsel %vm260, %v31, 0.0
    %s262 = scalar_lea.vmem [#allocation2], 640
    %v263 = vld [vmem:[%s262] sm:$0xff]
    %v264 = vld [vmem:[%s262 + $0x8] sm:$0xff]
    %v265 = vld [vmem:[%s262 + $0x10] sm:$0xff]
    %v266 = vld [vmem:[%s262 + $0x18] sm:$0xff]
    %v267 = vld [vmem:[%s262 + $0x20] sm:$0xff]
    %v268 = vld [vmem:[%s262 + $0x28] sm:$0xff]
    %v269 = vld [vmem:[%s262 + $0x30] sm:$0xff]
    %v270 = vld [vmem:[%s262 + $0x38] sm:$0xff]
    %v271 = vld [vmem:[%s262 + $0x40] sm:$0xff]
    %v272 = vld [vmem:[%s262 + $0x48] sm:$0xff]
    %v273 = vld [vmem:[%s262 + $0x50] sm:$0xff]
    %v274 = vld [vmem:[%s262 + $0x58] sm:$0xff]
    %v275 = vld [vmem:[%s262 + $0x60] sm:$0xff]
    %v276 = vld [vmem:[%s262 + $0x68] sm:$0xff]
    %v277 = vld [vmem:[%s262 + $0x70] sm:$0xff]
    %v278 = vld [vmem:[%s262 + $0x78] sm:$0xff]
    %279 = vmatpush.msra.mxu0 %v278
    %280 = vmatpush.msra.mxu0 %v277
    %281 = vmatpush.msra.mxu0 %v276
    %282 = vmatpush.msra.mxu0 %v275
    %283 = vmatpush.msra.mxu0 %v274
    %284 = vmatpush.msra.mxu0 %v273
    %285 = vmatpush.msra.mxu0 %v272
    %286 = vmatpush.msra.mxu0 %v271
    %287 = vmatpush.msra.mxu0 %v270
    %288 = vmatpush.msra.mxu0 %v269
    %289 = vmatpush.msra.mxu0 %v268
    %290 = vmatpush.msra.mxu0 %v267
    %291 = vmatpush.msra.mxu0 %v266
    %292 = vmatpush.msra.mxu0 %v265
    %293 = vmatpush.msra.mxu0 %v264
    %294 = vmatpush.msra.mxu0 %v263
    %295 = vmatmul.f32.gmra.mxu0 %v261
    %v296 = vpop.f32.mrf.mxu0
    %v297 = vadd.f32 0.0, %v296
    %298 = vdwg.mxu0
    %v299 = vadd.f32 %v254, %v297
    %vm300 = vcmp.eq.s32.totalorder %v32, 6
    %v301 = vsel %vm300, 1, 0
    %302 = vset.pattern.permute.xlu0 0
    %303 = vperm.xlu0 %302, %v301
    %v304 = vpop.permute.xlu0 %303
    %vm305 = vcmp.eq.s32.totalorder %v304, 1
    %v306 = vsel %vm305, %v31, 0.0
    %s307 = scalar_lea.vmem [#allocation2], 768
    %v308 = vld [vmem:[%s307] sm:$0xff]
    %v309 = vld [vmem:[%s307 + $0x8] sm:$0xff]
    %v310 = vld [vmem:[%s307 + $0x10] sm:$0xff]
    %v311 = vld [vmem:[%s307 + $0x18] sm:$0xff]
    %v312 = vld [vmem:[%s307 + $0x20] sm:$0xff]
    %v313 = vld [vmem:[%s307 + $0x28] sm:$0xff]
    %v314 = vld [vmem:[%s307 + $0x30] sm:$0xff]
    %v315 = vld [vmem:[%s307 + $0x38] sm:$0xff]
    %v316 = vld [vmem:[%s307 + $0x40] sm:$0xff]
    %v317 = vld [vmem:[%s307 + $0x48] sm:$0xff]
    %v318 = vld [vmem:[%s307 + $0x50] sm:$0xff]
    %v319 = vld [vmem:[%s307 + $0x58] sm:$0xff]
    %v320 = vld [vmem:[%s307 + $0x60] sm:$0xff]
    %v321 = vld [vmem:[%s307 + $0x68] sm:$0xff]
    %v322 = vld [vmem:[%s307 + $0x70] sm:$0xff]
    %v323 = vld [vmem:[%s307 + $0x78] sm:$0xff]
    %324 = vmatpush.msra.mxu0 %v323
    %325 = vmatpush.msra.mxu0 %v322
    %326 = vmatpush.msra.mxu0 %v321
    %327 = vmatpush.msra.mxu0 %v320
    %328 = vmatpush.msra.mxu0 %v319
    %329 = vmatpush.msra.mxu0 %v318
    %330 = vmatpush.msra.mxu0 %v317
    %331 = vmatpush.msra.mxu0 %v316
    %332 = vmatpush.msra.mxu0 %v315
    %333 = vmatpush.msra.mxu0 %v314
    %334 = vmatpush.msra.mxu0 %v313
    %335 = vmatpush.msra.mxu0 %v312
    %336 = vmatpush.msra.mxu0 %v311
    %337 = vmatpush.msra.mxu0 %v310
    %338 = vmatpush.msra.mxu0 %v309
    %339 = vmatpush.msra.mxu0 %v308
    %340 = vmatmul.f32.gmra.mxu0 %v306
    %v341 = vpop.f32.mrf.mxu0
    %v342 = vadd.f32 0.0, %v341
    %343 = vdwg.mxu0
    %v344 = vadd.f32 %v299, %v342
    %vm345 = vcmp.eq.s32.totalorder %v32, 7
    %v346 = vsel %vm345, 1, 0
    %347 = vset.pattern.permute.xlu0 0
    %348 = vperm.xlu0 %347, %v346
    %v349 = vpop.permute.xlu0 %348
    %vm350 = vcmp.eq.s32.totalorder %v349, 1
    %v351 = vsel %vm350, %v31, 0.0
    %s352 = scalar_lea.vmem [#allocation2], 896
    %v353 = vld [vmem:[%s352] sm:$0xff]
    %v354 = vld [vmem:[%s352 + $0x8] sm:$0xff]
    %v355 = vld [vmem:[%s352 + $0x10] sm:$0xff]
    %v356 = vld [vmem:[%s352 + $0x18] sm:$0xff]
    %v357 = vld [vmem:[%s352 + $0x20] sm:$0xff]
    %v358 = vld [vmem:[%s352 + $0x28] sm:$0xff]
    %v359 = vld [vmem:[%s352 + $0x30] sm:$0xff]
    %v360 = vld [vmem:[%s352 + $0x38] sm:$0xff]
    %v361 = vld [vmem:[%s352 + $0x40] sm:$0xff]
    %v362 = vld [vmem:[%s352 + $0x48] sm:$0xff]
    %v363 = vld [vmem:[%s352 + $0x50] sm:$0xff]
    %v364 = vld [vmem:[%s352 + $0x58] sm:$0xff]
    %v365 = vld [vmem:[%s352 + $0x60] sm:$0xff]
    %v366 = vld [vmem:[%s352 + $0x68] sm:$0xff]
    %v367 = vld [vmem:[%s352 + $0x70] sm:$0xff]
    %v368 = vld [vmem:[%s352 + $0x78] sm:$0xff]
    %369 = vmatpush.msra.mxu0 %v368
    %370 = vmatpush.msra.mxu0 %v367
    %371 = vmatpush.msra.mxu0 %v366
    %372 = vmatpush.msra.mxu0 %v365
    %373 = vmatpush.msra.mxu0 %v364
    %374 = vmatpush.msra.mxu0 %v363
    %375 = vmatpush.msra.mxu0 %v362
    %376 = vmatpush.msra.mxu0 %v361
    %377 = vmatpush.msra.mxu0 %v360
    %378 = vmatpush.msra.mxu0 %v359
    %379 = vmatpush.msra.mxu0 %v358
    %380 = vmatpush.msra.mxu0 %v357
    %381 = vmatpush.msra.mxu0 %v356
    %382 = vmatpush.msra.mxu0 %v355
    %383 = vmatpush.msra.mxu0 %v354
    %384 = vmatpush.msra.mxu0 %v353
    %385 = vmatmul.f32.gmra.mxu0 %v351
    %v386 = vpop.f32.mrf.mxu0
    %v387 = vadd.f32 0.0, %v386
    %388 = vdwg.mxu0
    %v389 = vadd.f32 %v344, %v387
    %390 = vst [vmem:[#allocation5] sm:$0xff] %v389
    // Predicated region
    $region18: #{tpu_custom_call.1} parent=1 // pred_check
      _
    $region19: #{tpu_custom_call.1} parent=1 // pred_check_branch
      %392 = sbr.rel (0) target = $region21
    $region20: #{tpu_custom_call.1} parent=1 // pred_region
      %394 = vsyncadd [#allocation4], 0
      %s396 = sshll.u32 [#allocation5], 4
      %s397 = int_to_ptr.vmem [resolvable:$true] %s396
      %s398 = sshll.u32 %s3, 4
      %s399 = int_to_ptr.hbm [resolvable:$true] %s398
      %401 = dma.vmem_to_hbm [thread:$0]  %s397, 128, %s399, [#allocation4]
    $region21: #{tpu_custom_call.1} parent=1 // pred_fallthru
      _
    // Predicated region
    $region22: #{tpu_custom_call.1} parent=1 // pred_check
      _
    $region23: #{tpu_custom_call.1} parent=1 // pred_check_branch
      %403 = sbr.rel (0) target = $region25
    $region24: #{tpu_custom_call.1} parent=1 // pred_region
      %405 = dma.done [#allocation4], 128
    $region25: #{tpu_custom_call.1} parent=1 // pred_fallthru
      _
    %406 = vsyncpa [#allocation3], 1
    %407 = vsyncpa [#allocation4], 1

// kernel: tpu_custom_call.1
$region0: #{tpu_custom_call.1}
  #allocation0 [shape = 'u32[]', space=smem, size = 0x4, offset = 0x4, fixed_abs, tag = 'smem constant byte address 0x4 - core index']
  #allocation1 [shape = 'u32[72,128]{1,0:T(1,128)}', space=vmem, size = 0x9000, scoped, tag = 'internal scratch']
  %s0 = inlined_call_operand.vmem [shape: s32[8,1], index: 0, kind: input, shape index: {}]
  %s1 = inlined_call_operand.vmem [shape: f32[8,128], index: 1, kind: input, shape index: {}]
  %s2 = inlined_call_operand.hbm [shape: f32[8,128,128], index: 2, kind: input, shape index: {}]
  %s3 = inlined_call_operand.hbm [shape: f32[8,128], index: 3, kind: output, shape index: {}]
  %s4 = sld [smem:[#allocation0]]
  $region26: #{tpu_custom_call.1} parent=0
    _
  %s6 = ssub.s32 1, %s4
  %s7 = scalar_select 0, %s6, %s4
  $region1: #{tpu_custom_call.1} parent=0
    #allocation2 [shape = 'u8[524288]{0}', space=vmem, size = 0x80000, scoped, tag = 'input window, operand 2, single buffered']
    #allocation3 [shape = 's32[1]{0}', space=sflag, size = 0x4, scoped, tag = 'scoped memory for tpu_custom_call.1']
    #allocation4 [shape = 's32[1]{0}', space=sflag, size = 0x4, scoped, tag = 'scoped memory for tpu_custom_call.1']
    #allocation5 [shape = 'u8[4096]{0}', space=vmem, size = 0x1000, scoped, tag = 'output window, operand 0, single buffered']
    %8 = vsyncpa [#allocation3], 0
    %9 = vsyncpa [#allocation4], 0
    // Predicated region
    $region2: #{tpu_custom_call.1} parent=1 // pred_check
      _
    $region3: #{tpu_custom_call.1} parent=1 // pred_check_branch
      %11 = sbr.rel (0) target = $region5
    $region4: #{tpu_custom_call.1} parent=1 // pred_region
      _
    $region5: #{tpu_custom_call.1} parent=1 // pred_fallthru
      _
    // Predicated region
    $region6: #{tpu_custom_call.1} parent=1 // pred_check
      _
    $region7: #{tpu_custom_call.1} parent=1 // pred_check_branch
      %13 = sbr.rel (0) target = $region9
    $region8: #{tpu_custom_call.1} parent=1 // pred_region
      _
    $region9: #{tpu_custom_call.1} parent=1 // pred_fallthru
      _
    // Predicated region
    $region10: #{tpu_custom_call.1} parent=1 // pred_check
      _
    $region11: #{tpu_custom_call.1} parent=1 // pred_check_branch
      %15 = sbr.rel (0) target = $region13
    $region12: #{tpu_custom_call.1} parent=1 // pred_region
      %17 = vsyncadd [#allocation3], 0
      %s18 = sshll.u32 %s2, 4
      %s19 = int_to_ptr.hbm [resolvable:$true] %s18
      %s20 = sshll.u32 [#allocation2], 4
      %s21 = int_to_ptr.vmem [resolvable:$true] %s20
      %26 = dma.hbm_to_vmem [thread:$0]  %s19, 16384, %s21, [#allocation3], 128, 128, 8
    $region13: #{tpu_custom_call.1} parent=1 // pred_fallthru
      _
    // Predicated region
    $region14: #{tpu_custom_call.1} parent=1 // pred_check
      _
    $region15: #{tpu_custom_call.1} parent=1 // pred_check_branch
      %28 = sbr.rel (0) target = $region17
    $region16: #{tpu_custom_call.1} parent=1 // pred_region
      %30 = dma.done [#allocation3], 16384
    $region17: #{tpu_custom_call.1} parent=1 // pred_fallthru
      _
    %v31 = vld [vmem:[%s1] sm:$0xff]
    %v32 = vld [vmem:[%s0] sm:$0xff]
    %vm33 = vcmp.eq.s32.totalorder %v32, 0
    %v34 = vsel %vm33, 1, 0
    %35 = vset.pattern.permute.xlu0 0
    %36 = vperm.xlu0 %35, %v34
    %v37 = vpop.permute.xlu0 %36
    %vm38 = vcmp.eq.s32.totalorder %v37, 1
    %v39 = vsel %vm38, %v31, 0.0
    %v40 = vld [vmem:[#allocation2] sm:$0xff]
    %v41 = vld [vmem:[#allocation2 + $0x8] sm:$0xff]
    %v42 = vld [vmem:[#allocation2 + $0x10] sm:$0xff]
    %v43 = vld [vmem:[#allocation2 + $0x18] sm:$0xff]
    %v44 = vld [vmem:[#allocation2 + $0x20] sm:$0xff]
    %v45 = vld [vmem:[#allocation2 + $0x28] sm:$0xff]
    %v46 = vld [vmem:[#allocation2 + $0x30] sm:$0xff]
    %v47 = vld [vmem:[#allocation2 + $0x38] sm:$0xff]
    %v48 = vld [vmem:[#allocation2 + $0x40] sm:$0xff]
    %v49 = vld [vmem:[#allocation2 + $0x48] sm:$0xff]
    %v50 = vld [vmem:[#allocation2 + $0x50] sm:$0xff]
    %v51 = vld [vmem:[#allocation2 + $0x58] sm:$0xff]
    %v52 = vld [vmem:[#allocation2 + $0x60] sm:$0xff]
    %v53 = vld [vmem:[#allocation2 + $0x68] sm:$0xff]
    %v54 = vld [vmem:[#allocation2 + $0x70] sm:$0xff]
    %v55 = vld [vmem:[#allocation2 + $0x78] sm:$0xff]
    %vm56 = vcmp.eq.s32.totalorder %v32, 1
    %v57 = vsel %vm56, 1, 0
    %58 = vset.pattern.permute.xlu0 0
    %59 = vperm.xlu0 %58, %v57
    %v60 = vpop.permute.xlu0 %59
    %vm61 = vcmp.eq.s32.totalorder %v60, 1
    %v62 = vsel %vm61, %v31, 0.0
    %s63 = scalar_lea.vmem [#allocation2], 128
    %v64 = vld [vmem:[%s63] sm:$0xff]
    %v65 = vld [vmem:[%s63 + $0x8] sm:$0xff]
    %v66 = vld [vmem:[%s63 + $0x10] sm:$0xff]
    %v67 = vld [vmem:[%s63 + $0x18] sm:$0xff]
    %v68 = vld [vmem:[%s63 + $0x20] sm:$0xff]
    %v69 = vld [vmem:[%s63 + $0x28] sm:$0xff]
    %v70 = vld [vmem:[%s63 + $0x30] sm:$0xff]
    %v71 = vld [vmem:[%s63 + $0x38] sm:$0xff]
    %v72 = vld [vmem:[%s63 + $0x40] sm:$0xff]
    %v73 = vld [vmem:[%s63 + $0x48] sm:$0xff]
    %v74 = vld [vmem:[%s63 + $0x50] sm:$0xff]
    %v75 = vld [vmem:[%s63 + $0x58] sm:$0xff]
    %v76 = vld [vmem:[%s63 + $0x60] sm:$0xff]
    %v77 = vld [vmem:[%s63 + $0x68] sm:$0xff]
    %v78 = vld [vmem:[%s63 + $0x70] sm:$0xff]
    %v79 = vld [vmem:[%s63 + $0x78] sm:$0xff]
    %80 = vmatpush.msra.mxu0 %v79
    %81 = vmatpush.msra.mxu0 %v78
    %82 = vmatpush.msra.mxu0 %v77
    %83 = vmatpush.msra.mxu0 %v76
    %84 = vmatpush.msra.mxu0 %v75
    %85 = vmatpush.msra.mxu0 %v74
    %86 = vmatpush.msra.mxu0 %v73
    %87 = vmatpush.msra.mxu0 %v72
    %88 = vmatpush.msra.mxu0 %v71
    %89 = vmatpush.msra.mxu0 %v70
    %90 = vmatpush.msra.mxu0 %v69
    %91 = vmatpush.msra.mxu0 %v68
    %92 = vmatpush.msra.mxu0 %v67
    %93 = vmatpush.msra.mxu0 %v66
    %94 = vmatpush.msra.mxu0 %v65
    %95 = vmatpush.msra.mxu0 %v64
    %96 = vmatmul.f32.gmra.mxu0 %v62
    %v97 = vpop.f32.mrf.mxu0
    %v98 = vadd.f32 0.0, %v97
    %99 = vdwg.mxu0
    %100 = vmatpush.msra.mxu0 %v55
    %101 = vmatpush.msra.mxu0 %v54
    %102 = vmatpush.msra.mxu0 %v53
    %103 = vmatpush.msra.mxu0 %v52
    %104 = vmatpush.msra.mxu0 %v51
    %105 = vmatpush.msra.mxu0 %v50
    %106 = vmatpush.msra.mxu0 %v49
    %107 = vmatpush.msra.mxu0 %v48
    %108 = vmatpush.msra.mxu0 %v47
    %109 = vmatpush.msra.mxu0 %v46
    %110 = vmatpush.msra.mxu0 %v45
    %111 = vmatpush.msra.mxu0 %v44
    %112 = vmatpush.msra.mxu0 %v43
    %113 = vmatpush.msra.mxu0 %v42
    %114 = vmatpush.msra.mxu0 %v41
    %115 = vmatpush.msra.mxu0 %v40
    %116 = vmatmul.f32.gmra.mxu0 %v39
    %v117 = vpop.f32.mrf.mxu0
    %v118 = vadd.f32 %v98, %v117
    %119 = vdwg.mxu0
    %vm120 = vcmp.eq.s32.totalorder %v32, 2
    %v121 = vsel %vm120, 1, 0
    %122 = vset.pattern.permute.xlu0 0
    %123 = vperm.xlu0 %122, %v121
    %v124 = vpop.permute.xlu0 %123
    %vm125 = vcmp.eq.s32.totalorder %v124, 1
    %v126 = vsel %vm125, %v31, 0.0
    %s127 = scalar_lea.vmem [#allocation2], 256
    %v128 = vld [vmem:[%s127] sm:$0xff]
    %v129 = vld [vmem:[%s127 + $0x8] sm:$0xff]
    %v130 = vld [vmem:[%s127 + $0x10] sm:$0xff]
    %v131 = vld [vmem:[%s127 + $0x18] sm:$0xff]
    %v132 = vld [vmem:[%s127 + $0x20] sm:$0xff]
    %v133 = vld [vmem:[%s127 + $0x28] sm:$0xff]
    %v134 = vld [vmem:[%s127 + $0x30] sm:$0xff]
    %v135 = vld [vmem:[%s127 + $0x38] sm:$0xff]
    %v136 = vld [vmem:[%s127 + $0x40] sm:$0xff]
    %v137 = vld [vmem:[%s127 + $0x48] sm:$0xff]
    %v138 = vld [vmem:[%s127 + $0x50] sm:$0xff]
    %v139 = vld [vmem:[%s127 + $0x58] sm:$0xff]
    %v140 = vld [vmem:[%s127 + $0x60] sm:$0xff]
    %v141 = vld [vmem:[%s127 + $0x68] sm:$0xff]
    %v142 = vld [vmem:[%s127 + $0x70] sm:$0xff]
    %v143 = vld [vmem:[%s127 + $0x78] sm:$0xff]
    %144 = vmatpush.msra.mxu0 %v143
    %145 = vmatpush.msra.mxu0 %v142
    %146 = vmatpush.msra.mxu0 %v141
    %147 = vmatpush.msra.mxu0 %v140
    %148 = vmatpush.msra.mxu0 %v139
    %149 = vmatpush.msra.mxu0 %v138
    %150 = vmatpush.msra.mxu0 %v137
    %151 = vmatpush.msra.mxu0 %v136
    %152 = vmatpush.msra.mxu0 %v135
    %153 = vmatpush.msra.mxu0 %v134
    %154 = vmatpush.msra.mxu0 %v133
    %155 = vmatpush.msra.mxu0 %v132
    %156 = vmatpush.msra.mxu0 %v131
    %157 = vmatpush.msra.mxu0 %v130
    %158 = vmatpush.msra.mxu0 %v129
    %159 = vmatpush.msra.mxu0 %v128
    %160 = vmatmul.f32.gmra.mxu0 %v126
    %v161 = vpop.f32.mrf.mxu0
    %v162 = vadd.f32 0.0, %v161
    %163 = vdwg.mxu0
    %v164 = vadd.f32 %v118, %v162
    %vm165 = vcmp.eq.s32.totalorder %v32, 3
    %v166 = vsel %vm165, 1, 0
    %167 = vset.pattern.permute.xlu0 0
    %168 = vperm.xlu0 %167, %v166
    %v169 = vpop.permute.xlu0 %168
    %vm170 = vcmp.eq.s32.totalorder %v169, 1
    %v171 = vsel %vm170, %v31, 0.0
    %s172 = scalar_lea.vmem [#allocation2], 384
    %v173 = vld [vmem:[%s172] sm:$0xff]
    %v174 = vld [vmem:[%s172 + $0x8] sm:$0xff]
    %v175 = vld [vmem:[%s172 + $0x10] sm:$0xff]
    %v176 = vld [vmem:[%s172 + $0x18] sm:$0xff]
    %v177 = vld [vmem:[%s172 + $0x20] sm:$0xff]
    %v178 = vld [vmem:[%s172 + $0x28] sm:$0xff]
    %v179 = vld [vmem:[%s172 + $0x30] sm:$0xff]
    %v180 = vld [vmem:[%s172 + $0x38] sm:$0xff]
    %v181 = vld [vmem:[%s172 + $0x40] sm:$0xff]
    %v182 = vld [vmem:[%s172 + $0x48] sm:$0xff]
    %v183 = vld [vmem:[%s172 + $0x50] sm:$0xff]
    %v184 = vld [vmem:[%s172 + $0x58] sm:$0xff]
    %v185 = vld [vmem:[%s172 + $0x60] sm:$0xff]
    %v186 = vld [vmem:[%s172 + $0x68] sm:$0xff]
    %v187 = vld [vmem:[%s172 + $0x70] sm:$0xff]
    %v188 = vld [vmem:[%s172 + $0x78] sm:$0xff]
    %189 = vmatpush.msra.mxu0 %v188
    %190 = vmatpush.msra.mxu0 %v187
    %191 = vmatpush.msra.mxu0 %v186
    %192 = vmatpush.msra.mxu0 %v185
    %193 = vmatpush.msra.mxu0 %v184
    %194 = vmatpush.msra.mxu0 %v183
    %195 = vmatpush.msra.mxu0 %v182
    %196 = vmatpush.msra.mxu0 %v181
    %197 = vmatpush.msra.mxu0 %v180
    %198 = vmatpush.msra.mxu0 %v179
    %199 = vmatpush.msra.mxu0 %v178
    %200 = vmatpush.msra.mxu0 %v177
    %201 = vmatpush.msra.mxu0 %v176
    %202 = vmatpush.msra.mxu0 %v175
    %203 = vmatpush.msra.mxu0 %v174
    %204 = vmatpush.msra.mxu0 %v173
    %205 = vmatmul.f32.gmra.mxu0 %v171
    %v206 = vpop.f32.mrf.mxu0
    %v207 = vadd.f32 0.0, %v206
    %208 = vdwg.mxu0
    %v209 = vadd.f32 %v164, %v207
    %vm210 = vcmp.eq.s32.totalorder %v32, 4
    %v211 = vsel %vm210, 1, 0
    %212 = vset.pattern.permute.xlu0 0
    %213 = vperm.xlu0 %212, %v211
    %v214 = vpop.permute.xlu0 %213
    %vm215 = vcmp.eq.s32.totalorder %v214, 1
    %v216 = vsel %vm215, %v31, 0.0
    %s217 = scalar_lea.vmem [#allocation2], 512
    %v218 = vld [vmem:[%s217] sm:$0xff]
    %v219 = vld [vmem:[%s217 + $0x8] sm:$0xff]
    %v220 = vld [vmem:[%s217 + $0x10] sm:$0xff]
    %v221 = vld [vmem:[%s217 + $0x18] sm:$0xff]
    %v222 = vld [vmem:[%s217 + $0x20] sm:$0xff]
    %v223 = vld [vmem:[%s217 + $0x28] sm:$0xff]
    %v224 = vld [vmem:[%s217 + $0x30] sm:$0xff]
    %v225 = vld [vmem:[%s217 + $0x38] sm:$0xff]
    %v226 = vld [vmem:[%s217 + $0x40] sm:$0xff]
    %v227 = vld [vmem:[%s217 + $0x48] sm:$0xff]
    %v228 = vld [vmem:[%s217 + $0x50] sm:$0xff]
    %v229 = vld [vmem:[%s217 + $0x58] sm:$0xff]
    %v230 = vld [vmem:[%s217 + $0x60] sm:$0xff]
    %v231 = vld [vmem:[%s217 + $0x68] sm:$0xff]
    %v232 = vld [vmem:[%s217 + $0x70] sm:$0xff]
    %v233 = vld [vmem:[%s217 + $0x78] sm:$0xff]
    %234 = vmatpush.msra.mxu0 %v233
    %235 = vmatpush.msra.mxu0 %v232
    %236 = vmatpush.msra.mxu0 %v231
    %237 = vmatpush.msra.mxu0 %v230
    %238 = vmatpush.msra.mxu0 %v229
    %239 = vmatpush.msra.mxu0 %v228
    %240 = vmatpush.msra.mxu0 %v227
    %241 = vmatpush.msra.mxu0 %v226
    %242 = vmatpush.msra.mxu0 %v225
    %243 = vmatpush.msra.mxu0 %v224
    %244 = vmatpush.msra.mxu0 %v223
    %245 = vmatpush.msra.mxu0 %v222
    %246 = vmatpush.msra.mxu0 %v221
    %247 = vmatpush.msra.mxu0 %v220
    %248 = vmatpush.msra.mxu0 %v219
    %249 = vmatpush.msra.mxu0 %v218
    %250 = vmatmul.f32.gmra.mxu0 %v216
    %v251 = vpop.f32.mrf.mxu0
    %v252 = vadd.f32 0.0, %v251
    %253 = vdwg.mxu0
    %v254 = vadd.f32 %v209, %v252
    %vm255 = vcmp.eq.s32.totalorder %v32, 5
    %v256 = vsel %vm255, 1, 0
    %257 = vset.pattern.permute.xlu0 0
    %258 = vperm.xlu0 %257, %v256
    %v259 = vpop.permute.xlu0 %258
    %vm260 = vcmp.eq.s32.totalorder %v259, 1
    %v261 = vsel %vm260, %v31, 0.0
    %s262 = scalar_lea.vmem [#allocation2], 640
    %v263 = vld [vmem:[%s262] sm:$0xff]
    %v264 = vld [vmem:[%s262 + $0x8] sm:$0xff]
    %v265 = vld [vmem:[%s262 + $0x10] sm:$0xff]
    %v266 = vld [vmem:[%s262 + $0x18] sm:$0xff]
    %v267 = vld [vmem:[%s262 + $0x20] sm:$0xff]
    %v268 = vld [vmem:[%s262 + $0x28] sm:$0xff]
    %v269 = vld [vmem:[%s262 + $0x30] sm:$0xff]
    %v270 = vld [vmem:[%s262 + $0x38] sm:$0xff]
    %v271 = vld [vmem:[%s262 + $0x40] sm:$0xff]
    %v272 = vld [vmem:[%s262 + $0x48] sm:$0xff]
    %v273 = vld [vmem:[%s262 + $0x50] sm:$0xff]
    %v274 = vld [vmem:[%s262 + $0x58] sm:$0xff]
    %v275 = vld [vmem:[%s262 + $0x60] sm:$0xff]
    %v276 = vld [vmem:[%s262 + $0x68] sm:$0xff]
    %v277 = vld [vmem:[%s262 + $0x70] sm:$0xff]
    %v278 = vld [vmem:[%s262 + $0x78] sm:$0xff]
    %279 = vmatpush.msra.mxu0 %v278
    %280 = vmatpush.msra.mxu0 %v277
    %281 = vmatpush.msra.mxu0 %v276
    %282 = vmatpush.msra.mxu0 %v275
    %283 = vmatpush.msra.mxu0 %v274
    %284 = vmatpush.msra.mxu0 %v273
    %285 = vmatpush.msra.mxu0 %v272
    %286 = vmatpush.msra.mxu0 %v271
    %287 = vmatpush.msra.mxu0 %v270
    %288 = vmatpush.msra.mxu0 %v269
    %289 = vmatpush.msra.mxu0 %v268
    %290 = vmatpush.msra.mxu0 %v267
    %291 = vmatpush.msra.mxu0 %v266
    %292 = vmatpush.msra.mxu0 %v265
    %293 = vmatpush.msra.mxu0 %v264
    %294 = vmatpush.msra.mxu0 %v263
    %295 = vmatmul.f32.gmra.mxu0 %v261
    %v296 = vpop.f32.mrf.mxu0
    %v297 = vadd.f32 0.0, %v296
    %298 = vdwg.mxu0
    %v299 = vadd.f32 %v254, %v297
    %vm300 = vcmp.eq.s32.totalorder %v32, 6
    %v301 = vsel %vm300, 1, 0
    %302 = vset.pattern.permute.xlu0 0
    %303 = vperm.xlu0 %302, %v301
    %v304 = vpop.permute.xlu0 %303
    %vm305 = vcmp.eq.s32.totalorder %v304, 1
    %v306 = vsel %vm305, %v31, 0.0
    %s307 = scalar_lea.vmem [#allocation2], 768
    %v308 = vld [vmem:[%s307] sm:$0xff]
    %v309 = vld [vmem:[%s307 + $0x8] sm:$0xff]
    %v310 = vld [vmem:[%s307 + $0x10] sm:$0xff]
    %v311 = vld [vmem:[%s307 + $0x18] sm:$0xff]
    %v312 = vld [vmem:[%s307 + $0x20] sm:$0xff]
    %v313 = vld [vmem:[%s307 + $0x28] sm:$0xff]
    %v314 = vld [vmem:[%s307 + $0x30] sm:$0xff]
    %v315 = vld [vmem:[%s307 + $0x38] sm:$0xff]
    %v316 = vld [vmem:[%s307 + $0x40] sm:$0xff]
    %v317 = vld [vmem:[%s307 + $0x48] sm:$0xff]
    %v318 = vld [vmem:[%s307 + $0x50] sm:$0xff]
    %v319 = vld [vmem:[%s307 + $0x58] sm:$0xff]
    %v320 = vld [vmem:[%s307 + $0x60] sm:$0xff]
    %v321 = vld [vmem:[%s307 + $0x68] sm:$0xff]
    %v322 = vld [vmem:[%s307 + $0x70] sm:$0xff]
    %v323 = vld [vmem:[%s307 + $0x78] sm:$0xff]
    %324 = vmatpush.msra.mxu0 %v323
    %325 = vmatpush.msra.mxu0 %v322
    %326 = vmatpush.msra.mxu0 %v321
    %327 = vmatpush.msra.mxu0 %v320
    %328 = vmatpush.msra.mxu0 %v319
    %329 = vmatpush.msra.mxu0 %v318
    %330 = vmatpush.msra.mxu0 %v317
    %331 = vmatpush.msra.mxu0 %v316
    %332 = vmatpush.msra.mxu0 %v315
    %333 = vmatpush.msra.mxu0 %v314
    %334 = vmatpush.msra.mxu0 %v313
    %335 = vmatpush.msra.mxu0 %v312
    %336 = vmatpush.msra.mxu0 %v311
    %337 = vmatpush.msra.mxu0 %v310
    %338 = vmatpush.msra.mxu0 %v309
    %339 = vmatpush.msra.mxu0 %v308
    %340 = vmatmul.f32.gmra.mxu0 %v306
    %v341 = vpop.f32.mrf.mxu0
    %v342 = vadd.f32 0.0, %v341
    %343 = vdwg.mxu0
    %v344 = vadd.f32 %v299, %v342
    %vm345 = vcmp.eq.s32.totalorder %v32, 7
    %v346 = vsel %vm345, 1, 0
    %347 = vset.pattern.permute.xlu0 0
    %348 = vperm.xlu0 %347, %v346
    %v349 = vpop.permute.xlu0 %348
    %vm350 = vcmp.eq.s32.totalorder %v349, 1
    %v351 = vsel %vm350, %v31, 0.0
    %s352 = scalar_lea.vmem [#allocation2], 896
    %v353 = vld [vmem:[%s352] sm:$0xff]
    %v354 = vld [vmem:[%s352 + $0x8] sm:$0xff]
    %v355 = vld [vmem:[%s352 + $0x10] sm:$0xff]
    %v356 = vld [vmem:[%s352 + $0x18] sm:$0xff]
    %v357 = vld [vmem:[%s352 + $0x20] sm:$0xff]
    %v358 = vld [vmem:[%s352 + $0x28] sm:$0xff]
    %v359 = vld [vmem:[%s352 + $0x30] sm:$0xff]
    %v360 = vld [vmem:[%s352 + $0x38] sm:$0xff]
    %v361 = vld [vmem:[%s352 + $0x40] sm:$0xff]
    %v362 = vld [vmem:[%s352 + $0x48] sm:$0xff]
    %v363 = vld [vmem:[%s352 + $0x50] sm:$0xff]
    %v364 = vld [vmem:[%s352 + $0x58] sm:$0xff]
    %v365 = vld [vmem:[%s352 + $0x60] sm:$0xff]
    %v366 = vld [vmem:[%s352 + $0x68] sm:$0xff]
    %v367 = vld [vmem:[%s352 + $0x70] sm:$0xff]
    %v368 = vld [vmem:[%s352 + $0x78] sm:$0xff]
    %369 = vmatpush.msra.mxu0 %v368
    %370 = vmatpush.msra.mxu0 %v367
    %371 = vmatpush.msra.mxu0 %v366
    %372 = vmatpush.msra.mxu0 %v365
    %373 = vmatpush.msra.mxu0 %v364
    %374 = vmatpush.msra.mxu0 %v363
    %375 = vmatpush.msra.mxu0 %v362
    %376 = vmatpush.msra.mxu0 %v361
    %377 = vmatpush.msra.mxu0 %v360
    %378 = vmatpush.msra.mxu0 %v359
    %379 = vmatpush.msra.mxu0 %v358
    %380 = vmatpush.msra.mxu0 %v357
    %381 = vmatpush.msra.mxu0 %v356
    %382 = vmatpush.msra.mxu0 %v355
    %383 = vmatpush.msra.mxu0 %v354
    %384 = vmatpush.msra.mxu0 %v353
    %385 = vmatmul.f32.gmra.mxu0 %v351
    %v386 = vpop.f32.mrf.mxu0
    %v387 = vadd.f32 0.0, %v386
    %388 = vdwg.mxu0
    %v389 = vadd.f32 %v344, %v387
    %390 = vst [vmem:[#allocation5] sm:$0xff] %v389
    // Predicated region
    $region18: #{tpu_custom_call.1} parent=1 // pred_check
      _
    $region19: #{tpu_custom_call.1} parent=1 // pred_check_branch
      %392 = sbr.rel (0) target = $region21
    $region20: #{tpu_custom_call.1} parent=1 // pred_region
      %394 = vsyncadd [#allocation4], 0
      %s396 = sshll.u32 [#allocation5], 4
      %s397 = int_to_ptr.vmem [resolvable:$true] %s396
      %s398 = sshll.u32 %s3, 4
      %s399 = int_to_ptr.hbm [resolvable:$true] %s398
      %401 = dma.vmem_to_hbm [thread:$0]  %s397, 128, %s399, [#allocation4]
    $region21: #{tpu_custom_call.1} parent=1 // pred_fallthru
      _
    // Predicated region
    $region22: #{tpu_custom_call.1} parent=1 // pred_check
      _
    $region23: #{tpu_custom_call.1} parent=1 // pred_check_branch
      %403 = sbr.rel (0) target = $region25
    $region24: #{tpu_custom_call.1} parent=1 // pred_region
      %405 = dma.done [#allocation4], 128
    $region25: #{tpu_custom_call.1} parent=1 // pred_fallthru
      _
    %406 = vsyncpa [#allocation3], 1
    %407 = vsyncpa [#allocation4], 1

</llo_original>
